<compile_context>
chip_gen: v6e
topology: v6e:2x2x1
jax: 0.10.0
libtpu: 0.0.40
codegen_flags: <defaults>
</compile_context>

<pallas_src>
import jax
import jax.numpy as jnp
from jax.experimental import pallas as pl
from jax.experimental.pallas import tpu as pltpu


def _discriminator_kernel(x_ref,
                          w1_ref, b1_ref,
                          w2_ref, b2_ref,
                          w3_ref, b3_ref,
                          w4_ref, b4_ref,
                          w5_ref, b5_ref,
                          o_ref):
    """One batch tile of the whole MLP; weights are VMEM-resident across tiles."""
    h = x_ref[...]  # (TB, H) f32

    # Layers 1-4: Linear -> Dropout(eval: identity) -> ReLU.
    # bf16 MXU matmuls with f32 accumulation; bias add + ReLU stay in f32.
    for w_ref, b_ref in ((w1_ref, b1_ref), (w2_ref, b2_ref),
                         (w3_ref, b3_ref), (w4_ref, b4_ref)):
        h = jnp.dot(h.astype(jnp.bfloat16), w_ref[...],
                    preferred_element_type=jnp.float32)
        h = jnp.maximum(h + b_ref[...], 0.0)

    # Final Linear(H//4, 1): a 1-column matmul wastes the MXU and pays the full
    # push/pop latency, so compute it as a lane-wise multiply + reduction.
    w5 = w5_ref[...].astype(jnp.float32)                       # (1, H//4)
    logits = jnp.sum(h * w5, axis=-1, keepdims=True) + b5_ref[...]

    # Sigmoid: exp on the EUP, approximate reciprocal also on the EUP slot
    # (keeps the VALU divide off the critical path).
    o_ref[...] = pl.reciprocal(1.0 + jnp.exp(-logits), approx=True)


def discriminator_forward(x, params):
    """x: [B, H] float32.  params: list of (W, b); W is (in, out) bf16, b (1, out) f32."""
    B, H = x.shape

    # Batch tile: whole batch if small, otherwise 256 rows (multiple of 8 sublanes).
    TB = B if B <= 256 else 256
    grid = (pl.cdiv(B, TB),)

    (w1, b1), (w2, b2), (w3, b3), (w4, b4), (w5, b5) = params
    w5_row = w5.T  # (1, H//4): row layout for the in-kernel VPU reduction
    flat = [x, w1, b1, w2, b2, w3, b3, w4, b4, w5_row, b5]

    def const_spec(a):
        # Whole array, same block at every grid step -> stays VMEM-resident.
        return pl.BlockSpec(a.shape, lambda i: (0,) * a.ndim)

    in_specs = [pl.BlockSpec((TB, H), lambda i: (i, 0))]
    in_specs += [const_spec(a) for a in flat[1:]]
    out_spec = pl.BlockSpec((TB, 1), lambda i: (i, 0))

    # Explicit VMEM budget: double-buffered operands + margin, floored at 16 MiB
    # and capped at 32 MiB for v7x portability.
    operand_bytes = sum(int(a.size) * a.dtype.itemsize for a in flat)
    operand_bytes += TB * 4  # output tile
    vmem_limit = int(min(max(2 * operand_bytes + (4 << 20), 16 << 20), 32 << 20))

    return pl.pallas_call(
        _discriminator_kernel,
        out_shape=jax.ShapeDtypeStruct((B, 1), jnp.float32),
        grid=grid,
        in_specs=in_specs,
        out_specs=out_spec,
        compiler_params=pltpu.CompilerParams(
            dimension_semantics=("parallel",),   # v7x: shard batch over 2 TCs
            vmem_limit_bytes=vmem_limit),
    )(*flat)


def init_params(hidden_dim, key, weight_dtype=jnp.bfloat16):
    """Deterministic init mirroring the Linear shapes in Discriminator.__init__."""
    dims = [
        (hidden_dim, hidden_dim),
        (hidden_dim, hidden_dim),
        (hidden_dim, hidden_dim // 2),
        (hidden_dim // 2, hidden_dim // 4),
        (hidden_dim // 4, 1),
    ]
    params = []
    for d_in, d_out in dims:
        key, kw, kb = jax.random.split(key, 3)
        bound = 1.0 / (d_in ** 0.5)
        w = jax.random.uniform(kw, (d_in, d_out), jnp.float32, -bound, bound)
        b = jax.random.uniform(kb, (1, d_out), jnp.float32, -bound, bound)
        params.append((w.astype(weight_dtype), b))
    return params


if __name__ == "__main__":
    key = jax.random.PRNGKey(0)
    B, H = 8, 32  # small batch, hidden_dim=32
    # NOTE: at this demo size every matmul is a fraction of one MXU tile, so wall
    # time is launch-overhead dominated; the tiling above is what matters at
    # realistic B / hidden_dim.

    k_x, k_p = jax.random.split(key)
    x = jax.random.normal(k_x, (B, H), jnp.float32)
    params = init_params(H, k_p)

    out = jax.block_until_ready(discriminator_forward(x, params))

    # Pure-JAX reference (same bf16-rounded weights, eval-mode dropout).
    ref = x
    for i, (w, b) in enumerate(params):
        ref = ref @ w.astype(jnp.float32) + b
        if i < len(params) - 1:
            ref = jnp.maximum(ref, 0.0)
        else:
            ref = jax.nn.sigmoid(ref)

    assert out.shape == (B, 1)
    max_err = float(jnp.max(jnp.abs(out - ref)))
    assert jnp.allclose(out, ref, atol=2e-2, rtol=2e-2), f"max abs err {max_err}"

    print("KERNEL_OK")
</pallas_src>

<mosaic_0001>
module attributes {stable_mosaic.version = 11 : i64} {
  func.func @_discriminator_kernel(%arg0: i32, %arg1: memref<8x32xf32, #tpu.memory_space<vmem>>, %arg2: memref<32x32xbf16, #tpu.memory_space<vmem>>, %arg3: memref<1x32xf32, #tpu.memory_space<vmem>>, %arg4: memref<32x32xbf16, #tpu.memory_space<vmem>>, %arg5: memref<1x32xf32, #tpu.memory_space<vmem>>, %arg6: memref<32x16xbf16, #tpu.memory_space<vmem>>, %arg7: memref<1x16xf32, #tpu.memory_space<vmem>>, %arg8: memref<16x8xbf16, #tpu.memory_space<vmem>>, %arg9: memref<1x8xf32, #tpu.memory_space<vmem>>, %arg10: memref<1x8xbf16, #tpu.memory_space<vmem>>, %arg11: memref<1x1xf32, #tpu.memory_space<vmem>>, %arg12: memref<8x1xf32, #tpu.memory_space<vmem>>) attributes {dimension_semantics = [#tpu.dimension_semantics<parallel>], iteration_bounds = array<i64: 1>, scalar_prefetch = 0 : i64, scratch_operands = 0 : i64, tpu.core_type = #tpu.core_type<tc>, window_params = [{transform_indices = @transform_0, window_bounds = array<i64: 8, 32>}, {pipeline_mode = #tpu.pipeline_mode<synchronous>, transform_indices = @transform_1, window_bounds = array<i64: 32, 32>}, {pipeline_mode = #tpu.pipeline_mode<synchronous>, transform_indices = @transform_2, window_bounds = array<i64: 1, 32>}, {pipeline_mode = #tpu.pipeline_mode<synchronous>, transform_indices = @transform_3, window_bounds = array<i64: 32, 32>}, {pipeline_mode = #tpu.pipeline_mode<synchronous>, transform_indices = @transform_4, window_bounds = array<i64: 1, 32>}, {pipeline_mode = #tpu.pipeline_mode<synchronous>, transform_indices = @transform_5, window_bounds = array<i64: 32, 16>}, {pipeline_mode = #tpu.pipeline_mode<synchronous>, transform_indices = @transform_6, window_bounds = array<i64: 1, 16>}, {pipeline_mode = #tpu.pipeline_mode<synchronous>, transform_indices = @transform_7, window_bounds = array<i64: 16, 8>}, {pipeline_mode = #tpu.pipeline_mode<synchronous>, transform_indices = @transform_8, window_bounds = array<i64: 1, 8>}, {pipeline_mode = #tpu.pipeline_mode<synchronous>, transform_indices = @transform_9, window_bounds = array<i64: 1, 8>}, {pipeline_mode = #tpu.pipeline_mode<synchronous>, transform_indices = @transform_10, window_bounds = array<i64: 1, 1>}, {transform_indices = @transform_11, window_bounds = array<i64: 8, 1>}]} {
    %c0 = arith.constant 0 : index
    %c0_0 = arith.constant 0 : index
    %0 = vector.load %arg1[%c0, %c0_0] : memref<8x32xf32, #tpu.memory_space<vmem>>, vector<8x32xf32>
    %1 = arith.truncf %0 : vector<8x32xf32> to vector<8x32xbf16>
    %c0_1 = arith.constant 0 : index
    %c0_2 = arith.constant 0 : index
    %2 = vector.load %arg2[%c0_1, %c0_2] : memref<32x32xbf16, #tpu.memory_space<vmem>>, vector<32x32xbf16>
    %cst = arith.constant dense<0.000000e+00> : vector<8x32xf32>
    %3 = tpu.matmul %1, %2, %cst {dimension_numbers = #tpu.dot_dimension_numbers<[1], [0], [0], [1], [0, 0, 1, 1], [], []>} : vector<8x32xbf16>, vector<32x32xbf16>, vector<8x32xf32> -> vector<8x32xf32>
    %c0_3 = arith.constant 0 : index
    %c0_4 = arith.constant 0 : index
    %4 = vector.load %arg3[%c0_3, %c0_4] : memref<1x32xf32, #tpu.memory_space<vmem>>, vector<1x32xf32>
    %5 = vector.broadcast %4 : vector<1x32xf32> to vector<8x32xf32>
    %6 = arith.addf %3, %5 : vector<8x32xf32>
    %cst_5 = arith.constant 0.000000e+00 : f32
    %7 = vector.broadcast %cst_5 : f32 to vector<8x32xf32>
    %8 = arith.maximumf %6, %7 : vector<8x32xf32>
    %9 = arith.truncf %8 : vector<8x32xf32> to vector<8x32xbf16>
    %c0_6 = arith.constant 0 : index
    %c0_7 = arith.constant 0 : index
    %10 = vector.load %arg4[%c0_6, %c0_7] : memref<32x32xbf16, #tpu.memory_space<vmem>>, vector<32x32xbf16>
    %cst_8 = arith.constant dense<0.000000e+00> : vector<8x32xf32>
    %11 = tpu.matmul %9, %10, %cst_8 {dimension_numbers = #tpu.dot_dimension_numbers<[1], [0], [0], [1], [0, 0, 1, 1], [], []>} : vector<8x32xbf16>, vector<32x32xbf16>, vector<8x32xf32> -> vector<8x32xf32>
    %c0_9 = arith.constant 0 : index
    %c0_10 = arith.constant 0 : index
    %12 = vector.load %arg5[%c0_9, %c0_10] : memref<1x32xf32, #tpu.memory_space<vmem>>, vector<1x32xf32>
    %13 = vector.broadcast %12 : vector<1x32xf32> to vector<8x32xf32>
    %14 = arith.addf %11, %13 : vector<8x32xf32>
    %cst_11 = arith.constant 0.000000e+00 : f32
    %15 = vector.broadcast %cst_11 : f32 to vector<8x32xf32>
    %16 = arith.maximumf %14, %15 : vector<8x32xf32>
    %17 = arith.truncf %16 : vector<8x32xf32> to vector<8x32xbf16>
    %c0_12 = arith.constant 0 : index
    %c0_13 = arith.constant 0 : index
    %18 = vector.load %arg6[%c0_12, %c0_13] : memref<32x16xbf16, #tpu.memory_space<vmem>>, vector<32x16xbf16>
    %cst_14 = arith.constant dense<0.000000e+00> : vector<8x16xf32>
    %19 = tpu.matmul %17, %18, %cst_14 {dimension_numbers = #tpu.dot_dimension_numbers<[1], [0], [0], [1], [0, 0, 1, 1], [], []>} : vector<8x32xbf16>, vector<32x16xbf16>, vector<8x16xf32> -> vector<8x16xf32>
    %c0_15 = arith.constant 0 : index
    %c0_16 = arith.constant 0 : index
    %20 = vector.load %arg7[%c0_15, %c0_16] : memref<1x16xf32, #tpu.memory_space<vmem>>, vector<1x16xf32>
    %21 = vector.broadcast %20 : vector<1x16xf32> to vector<8x16xf32>
    %22 = arith.addf %19, %21 : vector<8x16xf32>
    %cst_17 = arith.constant 0.000000e+00 : f32
    %23 = vector.broadcast %cst_17 : f32 to vector<8x16xf32>
    %24 = arith.maximumf %22, %23 : vector<8x16xf32>
    %25 = arith.truncf %24 : vector<8x16xf32> to vector<8x16xbf16>
    %c0_18 = arith.constant 0 : index
    %c0_19 = arith.constant 0 : index
    %26 = vector.load %arg8[%c0_18, %c0_19] : memref<16x8xbf16, #tpu.memory_space<vmem>>, vector<16x8xbf16>
    %cst_20 = arith.constant dense<0.000000e+00> : vector<8x8xf32>
    %27 = tpu.matmul %25, %26, %cst_20 {dimension_numbers = #tpu.dot_dimension_numbers<[1], [0], [0], [1], [0, 0, 1, 1], [], []>} : vector<8x16xbf16>, vector<16x8xbf16>, vector<8x8xf32> -> vector<8x8xf32>
    %c0_21 = arith.constant 0 : index
    %c0_22 = arith.constant 0 : index
    %28 = vector.load %arg9[%c0_21, %c0_22] : memref<1x8xf32, #tpu.memory_space<vmem>>, vector<1x8xf32>
    %29 = vector.broadcast %28 : vector<1x8xf32> to vector<8x8xf32>
    %30 = arith.addf %27, %29 : vector<8x8xf32>
    %cst_23 = arith.constant 0.000000e+00 : f32
    %31 = vector.broadcast %cst_23 : f32 to vector<8x8xf32>
    %32 = arith.maximumf %30, %31 : vector<8x8xf32>
    %c0_24 = arith.constant 0 : index
    %c0_25 = arith.constant 0 : index
    %33 = vector.load %arg10[%c0_24, %c0_25] : memref<1x8xbf16, #tpu.memory_space<vmem>>, vector<1x8xbf16>
    %34 = arith.extf %33 : vector<1x8xbf16> to vector<1x8xf32>
    %35 = vector.broadcast %34 : vector<1x8xf32> to vector<8x8xf32>
    %36 = arith.mulf %32, %35 : vector<8x8xf32>
    %cst_26 = arith.constant dense<0.000000e+00> : vector<8xf32>
    %37 = vector.multi_reduction <add>, %36, %cst_26 [1] : vector<8x8xf32> to vector<8xf32>
    %38 = vector.shape_cast %37 : vector<8xf32> to vector<8x1xf32>
    %c0_27 = arith.constant 0 : index
    %c0_28 = arith.constant 0 : index
    %39 = vector.load %arg11[%c0_27, %c0_28] : memref<1x1xf32, #tpu.memory_space<vmem>>, vector<1x1xf32>
    %40 = vector.broadcast %39 : vector<1x1xf32> to vector<8x1xf32>
    %41 = arith.addf %38, %40 : vector<8x1xf32>
    %cst_29 = arith.constant 0.000000e+00 : f32
    %42 = vector.broadcast %cst_29 : f32 to vector<8x1xf32>
    %43 = arith.subf %42, %41 : vector<8x1xf32>
    %44 = math.exp %43 : vector<8x1xf32>
    %cst_30 = arith.constant 1.000000e+00 : f32
    %45 = vector.broadcast %cst_30 : f32 to vector<8x1xf32>
    %46 = arith.addf %45, %44 : vector<8x1xf32>
    %47 = tpu.reciprocal %46 {approx = true} : vector<8x1xf32> -> vector<8x1xf32>
    %c0_31 = arith.constant 0 : index
    %c0_32 = arith.constant 0 : index
    %48 = vector.load %arg12[%c0_31, %c0_32] : memref<8x1xf32, #tpu.memory_space<vmem>>, vector<8x1xf32>
    tpu.vector_store %arg12[%c0_31, %c0_32], %47 {strides = array<i32>} : memref<8x1xf32, #tpu.memory_space<vmem>>, vector<8x1xf32>,
    return
  }
  func.func @transform_0(%arg0: i32) -> (i32, i32) {
    %c0_i32 = arith.constant 0 : i32
    %c0_i32_0 = arith.constant 0 : i32
    return %arg0, %c0_i32 : i32, i32
  }
  func.func @transform_1(%arg0: i32) -> (i32, i32) {
    %c0_i32 = arith.constant 0 : i32
    %c0_i32_0 = arith.constant 0 : i32
    %c0_i32_1 = arith.constant 0 : i32
    return %c0_i32, %c0_i32_0 : i32, i32
  }
  func.func @transform_2(%arg0: i32) -> (i32, i32) {
    %c0_i32 = arith.constant 0 : i32
    %c0_i32_0 = arith.constant 0 : i32
    %c0_i32_1 = arith.constant 0 : i32
    return %c0_i32, %c0_i32_0 : i32, i32
  }
  func.func @transform_3(%arg0: i32) -> (i32, i32) {
    %c0_i32 = arith.constant 0 : i32
    %c0_i32_0 = arith.constant 0 : i32
    %c0_i32_1 = arith.constant 0 : i32
    return %c0_i32, %c0_i32_0 : i32, i32
  }
  func.func @transform_4(%arg0: i32) -> (i32, i32) {
    %c0_i32 = arith.constant 0 : i32
    %c0_i32_0 = arith.constant 0 : i32
    %c0_i32_1 = arith.constant 0 : i32
    return %c0_i32, %c0_i32_0 : i32, i32
  }
  func.func @transform_5(%arg0: i32) -> (i32, i32) {
    %c0_i32 = arith.constant 0 : i32
    %c0_i32_0 = arith.constant 0 : i32
    %c0_i32_1 = arith.constant 0 : i32
    return %c0_i32, %c0_i32_0 : i32, i32
  }
  func.func @transform_6(%arg0: i32) -> (i32, i32) {
    %c0_i32 = arith.constant 0 : i32
    %c0_i32_0 = arith.constant 0 : i32
    %c0_i32_1 = arith.constant 0 : i32
    return %c0_i32, %c0_i32_0 : i32, i32
  }
  func.func @transform_7(%arg0: i32) -> (i32, i32) {
    %c0_i32 = arith.constant 0 : i32
    %c0_i32_0 = arith.constant 0 : i32
    %c0_i32_1 = arith.constant 0 : i32
    return %c0_i32, %c0_i32_0 : i32, i32
  }
  func.func @transform_8(%arg0: i32) -> (i32, i32) {
    %c0_i32 = arith.constant 0 : i32
    %c0_i32_0 = arith.constant 0 : i32
    %c0_i32_1 = arith.constant 0 : i32
    return %c0_i32, %c0_i32_0 : i32, i32
  }
  func.func @transform_9(%arg0: i32) -> (i32, i32) {
    %c0_i32 = arith.constant 0 : i32
    %c0_i32_0 = arith.constant 0 : i32
    %c0_i32_1 = arith.constant 0 : i32
    return %c0_i32, %c0_i32_0 : i32, i32
  }
  func.func @transform_10(%arg0: i32) -> (i32, i32) {
    %c0_i32 = arith.constant 0 : i32
    %c0_i32_0 = arith.constant 0 : i32
    %c0_i32_1 = arith.constant 0 : i32
    return %c0_i32, %c0_i32_0 : i32, i32
  }
  func.func @transform_11(%arg0: i32) -> (i32, i32) {
    %c0_i32 = arith.constant 0 : i32
    %c0_i32_0 = arith.constant 0 : i32
    return %arg0, %c0_i32 : i32, i32
  }
}

</mosaic_0001>

<llo_original>
// kernel: tpu_custom_call.1
$region0: #{tpu_custom_call.1}
  #allocation0 [shape = 'u32[]', space=smem, size = 0x4, offset = 0x4, fixed_abs, tag = 'smem constant byte address 0x4 - core index']
  #allocation1 [shape = 'u32[144,128]{1,0:T(1,128)}', space=vmem, size = 0x12000, scoped, tag = 'internal scratch']
  #allocation2 [shape = 'f32[1,1]{1,0:T(1,128)S(1)}', space=vmem, size = 0x200, scoped, tag = 'scoped memory for tpu_custom_call.1']
  %s0 = inlined_call_operand.hbm [shape: f32[8,32], index: 0, kind: input, shape index: {}]
  %s1 = inlined_call_operand.vmem [shape: bf16[32,32], index: 1, kind: input, shape index: {}]
  %s2 = inlined_call_operand.vmem [shape: f32[1,32], index: 2, kind: input, shape index: {}]
  %s3 = inlined_call_operand.vmem [shape: bf16[32,32], index: 3, kind: input, shape index: {}]
  %s4 = inlined_call_operand.hbm [shape: f32[1,32], index: 4, kind: input, shape index: {}]
  %s5 = inlined_call_operand.vmem [shape: bf16[32,16], index: 5, kind: input, shape index: {}]
  %s6 = inlined_call_operand.vmem [shape: f32[1,16], index: 6, kind: input, shape index: {}]
  %s7 = inlined_call_operand.vmem [shape: bf16[16,8], index: 7, kind: input, shape index: {}]
  %s8 = inlined_call_operand.vmem [shape: f32[1,8], index: 8, kind: input, shape index: {}]
  %s9 = inlined_call_operand.vmem [shape: bf16[1,8], index: 9, kind: input, shape index: {}]
  %s10 = inlined_call_operand.<no memory space> [shape: f32[1,1], index: 10, kind: input, shape index: {}]
  %s11 = inlined_call_operand.vmem [shape: f32[8,1], index: 11, kind: output, shape index: {}]
  %s12 = sld [smem:[#allocation0]]
  $region62: #{tpu_custom_call.1} parent=0
    _
  %s14 = ssub.s32 1, %s12
  %s15 = scalar_select 0, %s14, %s12
  %v16 = vstv %s10
  %17 = vst [vmem:[#allocation2] sm:$0x1] %v16
  $region1: #{tpu_custom_call.1} parent=0
    #allocation3 [shape = 'u8[4096]{0}', space=vmem, size = 0x1000, scoped, tag = 'input window, operand 0, single buffered']
    #allocation4 [shape = 's32[1]{0}', space=sflag, size = 0x4, scoped, tag = 'scoped memory for tpu_custom_call.1']
    #allocation5 [shape = 'u8[512]{0}', space=vmem, size = 0x400, scoped, tag = 'input window, operand 4, single buffered']
    #allocation6 [shape = 's32[1]{0}', space=sflag, size = 0x4, scoped, tag = 'scoped memory for tpu_custom_call.1']
    %18 = vsyncpa [#allocation4], 0
    %19 = vsyncpa [#allocation6], 0
    // Predicated region
    $region2: #{tpu_custom_call.1} parent=1 // pred_check
      _
    $region3: #{tpu_custom_call.1} parent=1 // pred_check_branch
      %21 = sbr.rel (0) target = $region5
    $region4: #{tpu_custom_call.1} parent=1 // pred_region
      %s23 = ssub.s32 128, 128
      %24 = vsyncadd [#allocation4], %s23
      %s26 = sshll.u32 [#allocation3], 4
      %s27 = int_to_ptr.vmem [resolvable:$true] %s26
      %29 = dma.hbm_to_vmem [thread:$0]  %s0, 128, %s27, [#allocation4]
    $region5: #{tpu_custom_call.1} parent=1 // pred_fallthru
      _
    // Predicated region
    $region6: #{tpu_custom_call.1} parent=1 // pred_check
      _
    $region7: #{tpu_custom_call.1} parent=1 // pred_check_branch
      %31 = sbr.rel (0) target = $region9
    $region8: #{tpu_custom_call.1} parent=1 // pred_region
      _
    $region9: #{tpu_custom_call.1} parent=1 // pred_fallthru
      _
    // Predicated region
    $region10: #{tpu_custom_call.1} parent=1 // pred_check
      _
    $region11: #{tpu_custom_call.1} parent=1 // pred_check_branch
      %33 = sbr.rel (0) target = $region13
    $region12: #{tpu_custom_call.1} parent=1 // pred_region
      _
    $region13: #{tpu_custom_call.1} parent=1 // pred_fallthru
      _
    // Predicated region
    $region14: #{tpu_custom_call.1} parent=1 // pred_check
      _
    $region15: #{tpu_custom_call.1} parent=1 // pred_check_branch
      %35 = sbr.rel (0) target = $region17
    $region16: #{tpu_custom_call.1} parent=1 // pred_region
      _
    $region17: #{tpu_custom_call.1} parent=1 // pred_fallthru
      _
    // Predicated region
    $region18: #{tpu_custom_call.1} parent=1 // pred_check
      _
    $region19: #{tpu_custom_call.1} parent=1 // pred_check_branch
      %37 = sbr.rel (0) target = $region21
    $region20: #{tpu_custom_call.1} parent=1 // pred_region
      %s39 = ssub.s32 16, 16
      %40 = vsyncadd [#allocation6], %s39
      %s42 = sshll.u32 [#allocation5], 4
      %s43 = int_to_ptr.vmem [resolvable:$true] %s42
      %45 = dma.hbm_to_vmem [thread:$0]  %s4, 16, %s43, [#allocation6]
    $region21: #{tpu_custom_call.1} parent=1 // pred_fallthru
      _
    // Predicated region
    $region22: #{tpu_custom_call.1} parent=1 // pred_check
      _
    $region23: #{tpu_custom_call.1} parent=1 // pred_check_branch
      %47 = sbr.rel (0) target = $region25
    $region24: #{tpu_custom_call.1} parent=1 // pred_region
      _
    $region25: #{tpu_custom_call.1} parent=1 // pred_fallthru
      _
    // Predicated region
    $region26: #{tpu_custom_call.1} parent=1 // pred_check
      _
    $region27: #{tpu_custom_call.1} parent=1 // pred_check_branch
      %49 = sbr.rel (0) target = $region29
    $region28: #{tpu_custom_call.1} parent=1 // pred_region
      _
    $region29: #{tpu_custom_call.1} parent=1 // pred_fallthru
      _
    // Predicated region
    $region30: #{tpu_custom_call.1} parent=1 // pred_check
      _
    $region31: #{tpu_custom_call.1} parent=1 // pred_check_branch
      %51 = sbr.rel (0) target = $region33
    $region32: #{tpu_custom_call.1} parent=1 // pred_region
      _
    $region33: #{tpu_custom_call.1} parent=1 // pred_fallthru
      _
    // Predicated region
    $region34: #{tpu_custom_call.1} parent=1 // pred_check
      _
    $region35: #{tpu_custom_call.1} parent=1 // pred_check_branch
      %53 = sbr.rel (0) target = $region37
    $region36: #{tpu_custom_call.1} parent=1 // pred_region
      _
    $region37: #{tpu_custom_call.1} parent=1 // pred_fallthru
      _
    // Predicated region
    $region38: #{tpu_custom_call.1} parent=1 // pred_check
      _
    $region39: #{tpu_custom_call.1} parent=1 // pred_check_branch
      %55 = sbr.rel (0) target = $region41
    $region40: #{tpu_custom_call.1} parent=1 // pred_region
      _
    $region41: #{tpu_custom_call.1} parent=1 // pred_fallthru
      _
    // Predicated region
    $region42: #{tpu_custom_call.1} parent=1 // pred_check
      _
    $region43: #{tpu_custom_call.1} parent=1 // pred_check_branch
      %57 = sbr.rel (0) target = $region45
    $region44: #{tpu_custom_call.1} parent=1 // pred_region
      _
    $region45: #{tpu_custom_call.1} parent=1 // pred_fallthru
      _
    // Predicated region
    $region46: #{tpu_custom_call.1} parent=1 // pred_check
      _
    $region47: #{tpu_custom_call.1} parent=1 // pred_check_branch
      %59 = sbr.rel (0) target = $region49
    $region48: #{tpu_custom_call.1} parent=1 // pred_region
      %60 = dma.done [#allocation4], 128
    $region49: #{tpu_custom_call.1} parent=1 // pred_fallthru
      _
    // Predicated region
    $region50: #{tpu_custom_call.1} parent=1 // pred_check
      _
    $region51: #{tpu_custom_call.1} parent=1 // pred_check_branch
      %62 = sbr.rel (0) target = $region53
    $region52: #{tpu_custom_call.1} parent=1 // pred_region
      %63 = dma.done [#allocation6], 16
    $region53: #{tpu_custom_call.1} parent=1 // pred_fallthru
      _
    %v65 = vld [vmem:[#allocation3] sm:$0xff]
    %v66 = vpack.c.bf16 %v65, %v65
    %v67 = vld [vmem:[%s1] sm:$0xf]
    %v68 = vld [vmem:[%s1 + $0x4] sm:$0xf]
    %v69 = vld [vmem:[%s1 + $0x8] sm:$0xf]
    %v70 = vld [vmem:[%s1 + $0xc] sm:$0xf]
    %v71 = vld [vmem:[%s2] sm:$0x1]
    %v73 = vlaneseq
    %v74 = vshrl.u32 %v73, 7
    %v75 = vsub.s32 0, %v74
    %v76 = vrot.slane %v71, %v75
    %v82 = vunpack.c.l.b16 %v67
    %v83 = vunpack.c.l.b16 %v68
    %v84 = vunpack.c.l.b16 %v69
    %v85 = vunpack.c.l.b16 %v70
    %v86 = vpack.c.b16 %v83, %v82
    %v87 = vpack.c.b16 %v85, %v84
    %vm90 = vcmask 261120
    %v92 = vsel %vm90, %v66, 0
    %94 = vmatprep.subr.bf16.mxu0 0
    %95 = vmatpush1.bf16.msra.mxu0 0
    %96 = vmatprep.subr.bf16.mxu0 0
    %97 = vmatpush1.bf16.msra.mxu0 0
    %98 = vmatprep.subr.bf16.mxu0 0
    %99 = vmatpush1.bf16.msra.mxu0 0
    %100 = vmatprep.subr.bf16.mxu0 0
    %101 = vmatpush1.bf16.msra.mxu0 0
    %102 = vmatprep.subr.bf16.mxu0 0
    %103 = vmatpush1.bf16.msra.mxu0 0
    %104 = vmatprep.subr.bf16.mxu0 0
    %105 = vmatpush1.bf16.msra.mxu0 0
    %106 = vmatprep.subr.bf16.mxu0 0
    %107 = vmatpush1.bf16.msra.mxu0 %v87
    %108 = vmatprep.subr.bf16.mxu0 0
    %109 = vmatpush1.bf16.msra.mxu0 %v86
    %110 = vmatprep.subr.bf16.mxu0 0
    %111 = vmatpush2.bf16.msra.mxu0 0
    %112 = vmatprep.subr.bf16.mxu0 0
    %113 = vmatpush2.bf16.msra.mxu0 0
    %114 = vmatprep.subr.bf16.mxu0 0
    %115 = vmatpush2.bf16.msra.mxu0 0
    %116 = vmatprep.subr.bf16.mxu0 0
    %117 = vmatpush2.bf16.msra.mxu0 0
    %118 = vmatprep.subr.bf16.mxu0 0
    %119 = vmatpush2.bf16.msra.mxu0 0
    %120 = vmatprep.subr.bf16.mxu0 0
    %121 = vmatpush2.bf16.msra.mxu0 0
    %122 = vmatprep.subr.bf16.mxu0 0
    %123 = vmatpush2.bf16.msra.mxu0 0
    %124 = vmatprep.subr.bf16.mxu0 0
    %125 = vmatpush2.bf16.msra.mxu0 0
    %126 = vmatprep.mubr.bf16.mxu0 0
    %127 = vmatmul.mubr.bf16.gmra.mxu0 %v92
    %v128 = vpop.f32.mrf.mxu0
    %v129 = vadd.f32 %v76, %v128
    %v130 = vpop.f32.mrf.mxu0
    %v131 = vpop.f32.mrf.mxu0
    %v132 = vpop.f32.mrf.mxu0
    %133 = vdwg.mxu0
    %v134 = vmax.f32 %v129, 0.0
    %v135 = vpack.c.bf16 %v134, %v134
    %v136 = vld [vmem:[%s3] sm:$0xf]
    %v137 = vld [vmem:[%s3 + $0x4] sm:$0xf]
    %v138 = vld [vmem:[%s3 + $0x8] sm:$0xf]
    %v139 = vld [vmem:[%s3 + $0xc] sm:$0xf]
    %v140 = vld [vmem:[#allocation5] sm:$0x1]
    %v142 = vlaneseq
    %v143 = vshrl.u32 %v142, 7
    %v144 = vsub.s32 0, %v143
    %v145 = vrot.slane %v140, %v144
    %v151 = vunpack.c.l.b16 %v136
    %v152 = vunpack.c.l.b16 %v137
    %v153 = vunpack.c.l.b16 %v138
    %v154 = vunpack.c.l.b16 %v139
    %v155 = vpack.c.b16 %v152, %v151
    %v156 = vpack.c.b16 %v154, %v153
    %v160 = vsel %vm90, %v135, 0
    %162 = vmatprep.subr.bf16.mxu0 0
    %163 = vmatpush1.bf16.msra.mxu0 0
    %164 = vmatprep.subr.bf16.mxu0 0
    %165 = vmatpush1.bf16.msra.mxu0 0
    %166 = vmatprep.subr.bf16.mxu0 0
    %167 = vmatpush1.bf16.msra.mxu0 0
    %168 = vmatprep.subr.bf16.mxu0 0
    %169 = vmatpush1.bf16.msra.mxu0 0
    %170 = vmatprep.subr.bf16.mxu0 0
    %171 = vmatpush1.bf16.msra.mxu0 0
    %172 = vmatprep.subr.bf16.mxu0 0
    %173 = vmatpush1.bf16.msra.mxu0 0
    %174 = vmatprep.subr.bf16.mxu0 0
    %175 = vmatpush1.bf16.msra.mxu0 %v156
    %176 = vmatprep.subr.bf16.mxu0 0
    %177 = vmatpush1.bf16.msra.mxu0 %v155
    %178 = vmatprep.subr.bf16.mxu0 0
    %179 = vmatpush2.bf16.msra.mxu0 0
    %180 = vmatprep.subr.bf16.mxu0 0
    %181 = vmatpush2.bf16.msra.mxu0 0
    %182 = vmatprep.subr.bf16.mxu0 0
    %183 = vmatpush2.bf16.msra.mxu0 0
    %184 = vmatprep.subr.bf16.mxu0 0
    %185 = vmatpush2.bf16.msra.mxu0 0
    %186 = vmatprep.subr.bf16.mxu0 0
    %187 = vmatpush2.bf16.msra.mxu0 0
    %188 = vmatprep.subr.bf16.mxu0 0
    %189 = vmatpush2.bf16.msra.mxu0 0
    %190 = vmatprep.subr.bf16.mxu0 0
    %191 = vmatpush2.bf16.msra.mxu0 0
    %192 = vmatprep.subr.bf16.mxu0 0
    %193 = vmatpush2.bf16.msra.mxu0 0
    %194 = vmatprep.mubr.bf16.mxu0 0
    %195 = vmatmul.mubr.bf16.gmra.mxu0 %v160
    %v196 = vpop.f32.mrf.mxu0
    %v197 = vadd.f32 %v145, %v196
    %v198 = vpop.f32.mrf.mxu0
    %v199 = vpop.f32.mrf.mxu0
    %v200 = vpop.f32.mrf.mxu0
    %201 = vdwg.mxu0
    %v202 = vmax.f32 %v197, 0.0
    %v203 = vpack.c.bf16 %v202, %v202
    %v204 = vld [vmem:[%s5] sm:$0xf]
    %v205 = vld [vmem:[%s5 + $0x4] sm:$0xf]
    %v206 = vld [vmem:[%s5 + $0x8] sm:$0xf]
    %v207 = vld [vmem:[%s5 + $0xc] sm:$0xf]
    %v208 = vld [vmem:[%s6] sm:$0x1]
    %v210 = vlaneseq
    %v211 = vshrl.u32 %v210, 7
    %v212 = vsub.s32 0, %v211
    %v213 = vrot.slane %v208, %v212
    %v219 = vunpack.c.l.b16 %v204
    %v220 = vunpack.c.l.b16 %v205
    %v221 = vunpack.c.l.b16 %v206
    %v222 = vunpack.c.l.b16 %v207
    %v223 = vpack.c.b16 %v220, %v219
    %v224 = vpack.c.b16 %v222, %v221
    %v228 = vsel %vm90, %v203, 0
    %230 = vmatprep.subr.bf16.mxu0 0
    %231 = vmatpush1.bf16.msra.mxu0 0
    %232 = vmatprep.subr.bf16.mxu0 0
    %233 = vmatpush1.bf16.msra.mxu0 0
    %234 = vmatprep.subr.bf16.mxu0 0
    %235 = vmatpush1.bf16.msra.mxu0 0
    %236 = vmatprep.subr.bf16.mxu0 0
    %237 = vmatpush1.bf16.msra.mxu0 0
    %238 = vmatprep.subr.bf16.mxu0 0
    %239 = vmatpush1.bf16.msra.mxu0 0
    %240 = vmatprep.subr.bf16.mxu0 0
    %241 = vmatpush1.bf16.msra.mxu0 0
    %242 = vmatprep.subr.bf16.mxu0 0
    %243 = vmatpush1.bf16.msra.mxu0 %v224
    %244 = vmatprep.subr.bf16.mxu0 0
    %245 = vmatpush1.bf16.msra.mxu0 %v223
    %246 = vmatprep.subr.bf16.mxu0 0
    %247 = vmatpush2.bf16.msra.mxu0 0
    %248 = vmatprep.subr.bf16.mxu0 0
    %249 = vmatpush2.bf16.msra.mxu0 0
    %250 = vmatprep.subr.bf16.mxu0 0
    %251 = vmatpush2.bf16.msra.mxu0 0
    %252 = vmatprep.subr.bf16.mxu0 0
    %253 = vmatpush2.bf16.msra.mxu0 0
    %254 = vmatprep.subr.bf16.mxu0 0
    %255 = vmatpush2.bf16.msra.mxu0 0
    %256 = vmatprep.subr.bf16.mxu0 0
    %257 = vmatpush2.bf16.msra.mxu0 0
    %258 = vmatprep.subr.bf16.mxu0 0
    %259 = vmatpush2.bf16.msra.mxu0 0
    %260 = vmatprep.subr.bf16.mxu0 0
    %261 = vmatpush2.bf16.msra.mxu0 0
    %262 = vmatprep.mubr.bf16.mxu0 0
    %263 = vmatmul.mubr.bf16.gmra.mxu0 %v228
    %v264 = vpop.f32.mrf.mxu0
    %v265 = vadd.f32 %v213, %v264
    %v266 = vpop.f32.mrf.mxu0
    %v267 = vpop.f32.mrf.mxu0
    %v268 = vpop.f32.mrf.mxu0
    %269 = vdwg.mxu0
    %v270 = vmax.f32 %v265, 0.0
    %v271 = vpack.c.bf16 %v270, %v270
    %v272 = vld [vmem:[%s7] sm:$0xf]
    %v273 = vld [vmem:[%s7 + $0x4] sm:$0xf]
    %v274 = vld [vmem:[%s8] sm:$0x1]
    %v276 = vlaneseq
    %v277 = vshrl.u32 %v276, 7
    %v278 = vsub.s32 0, %v277
    %v279 = vrot.slane %v274, %v278
    %v283 = vunpack.c.l.b16 %v272
    %v284 = vunpack.c.l.b16 %v273
    %v285 = vpack.c.b16 %v284, %v283
    %vm287 = vcmask 130048
    %v289 = vsel %vm287, %v271, 0
    %291 = vmatprep.subr.bf16.mxu0 0
    %292 = vmatpush1.bf16.msra.mxu0 0
    %293 = vmatprep.subr.bf16.mxu0 0
    %294 = vmatpush1.bf16.msra.mxu0 0
    %295 = vmatprep.subr.bf16.mxu0 0
    %296 = vmatpush1.bf16.msra.mxu0 0
    %297 = vmatprep.subr.bf16.mxu0 0
    %298 = vmatpush1.bf16.msra.mxu0 0
    %299 = vmatprep.subr.bf16.mxu0 0
    %300 = vmatpush1.bf16.msra.mxu0 0
    %301 = vmatprep.subr.bf16.mxu0 0
    %302 = vmatpush1.bf16.msra.mxu0 0
    %303 = vmatprep.subr.bf16.mxu0 0
    %304 = vmatpush1.bf16.msra.mxu0 0
    %305 = vmatprep.subr.bf16.mxu0 0
    %306 = vmatpush1.bf16.msra.mxu0 %v285
    %307 = vmatprep.subr.bf16.mxu0 0
    %308 = vmatpush2.bf16.msra.mxu0 0
    %309 = vmatprep.subr.bf16.mxu0 0
    %310 = vmatpush2.bf16.msra.mxu0 0
    %311 = vmatprep.subr.bf16.mxu0 0
    %312 = vmatpush2.bf16.msra.mxu0 0
    %313 = vmatprep.subr.bf16.mxu0 0
    %314 = vmatpush2.bf16.msra.mxu0 0
    %315 = vmatprep.subr.bf16.mxu0 0
    %316 = vmatpush2.bf16.msra.mxu0 0
    %317 = vmatprep.subr.bf16.mxu0 0
    %318 = vmatpush2.bf16.msra.mxu0 0
    %319 = vmatprep.subr.bf16.mxu0 0
    %320 = vmatpush2.bf16.msra.mxu0 0
    %321 = vmatprep.subr.bf16.mxu0 0
    %322 = vmatpush2.bf16.msra.mxu0 0
    %323 = vmatprep.mubr.bf16.mxu0 0
    %324 = vmatmul.mubr.bf16.gmra.mxu0 %v289
    %v325 = vpop.f32.mrf.mxu0
    %v326 = vadd.f32 %v279, %v325
    %v327 = vpop.f32.mrf.mxu0
    %v328 = vpop.f32.mrf.mxu0
    %v329 = vpop.f32.mrf.mxu0
    %330 = vdwg.mxu0
    %v331 = vmax.f32 %v326, 0.0
    %v332 = vld [vmem:[%s9] sm:$0x1]
    %v333 = vunpack.c.l.bf16 %v332
    %v334 = vlaneseq
    %v335 = vshrl.u32 %v334, 7
    %v336 = vsub.s32 0, %v335
    %v337 = vrot.slane %v333, %v336
    %v338 = vmul.f32 %v331, %v337
    %vm339 = vcmask 64512
    %v340 = vsel %vm339, %v338, 0.0
    %341 = vadd.xlane.f32.xlu0 %v340
    %v342 = vpop.xlane.xlu0 %341
    %v343 = vld [vmem:[#allocation2] sm:$0x1]
    %v345 = vlaneseq
    %v346 = vshrl.u32 %v345, 7
    %v347 = vsub.s32 0, %v346
    %v348 = vrot.slane %v343, %v347
    %v350 = vadd.f32 %v342, %v348
    %v351 = vsub.f32 0.0, %v350
    %v352 = vmul.f32 %v351, 1.442695
    %v353 = vpow.pop %v352
    %v354 = vadd.f32 %v353, 1.0
    %v355 = vrcp.pop %v354
    %vm356 = vcmask 7168
    %357 = vst.msk [vmem:[%s11] sm:$0xff] %vm356, %v355
    // Predicated region
    $region54: #{tpu_custom_call.1} parent=1 // pred_check
      _
    $region55: #{tpu_custom_call.1} parent=1 // pred_check_branch
      %359 = sbr.rel (0) target = $region57
    $region56: #{tpu_custom_call.1} parent=1 // pred_region
      _
    $region57: #{tpu_custom_call.1} parent=1 // pred_fallthru
      _
    // Predicated region
    $region58: #{tpu_custom_call.1} parent=1 // pred_check
      _
    $region59: #{tpu_custom_call.1} parent=1 // pred_check_branch
      %361 = sbr.rel (0) target = $region61
    $region60: #{tpu_custom_call.1} parent=1 // pred_region
      _
    $region61: #{tpu_custom_call.1} parent=1 // pred_fallthru
      _
    %362 = vsyncpa [#allocation4], 1
    %363 = vsyncpa [#allocation6], 1

</llo_original>
